<compile_context>
chip_gen: v7x
topology: tpu7x:2x2x1
jax: 0.10.0
libtpu: 0.0.40
codegen_flags: <defaults>
</compile_context>

<pallas_src>
import functools

import jax
import jax.numpy as jnp
from jax import lax
from jax.experimental import pallas as pl
from jax.experimental.pallas import tpu as pltpu

LANES = 128                      # vreg lane width
SUBLANES = 8                     # f32 sublane tile
BLOCK_BYTES = 4 * 1024 * 1024    # ~4 MiB per streamed block (2x buffered = 8 MiB)
MAX_SLAB_ROWS = 64               # (64,128) f32 slab = 8 vregs -> never spills


def _round_up(a, b):
    return ((a + b - 1) // b) * b


def _gan_loss_kernel(x_ref, out_ref, *, gan_type, target_val, target_is_real,
                     slab_rows, n_slabs, n_slabs_last, valid_rows_last,
                     tiles_per_split, n_tiles, has_partial, may_clamp):
    """Adds this tile's per-element loss into a per-split (8,128) partial sum."""
    c = pl.program_id(0)           # "parallel" split axis (2 TCs on v7x)
    k = pl.program_id(1)           # "arbitrary" reduction axis
    t = c * tiles_per_split + k    # global tile index

    @pl.when(k == 0)
    def _():
        out_ref[...] = jnp.zeros_like(out_ref)

    def per_elt(xf):
        if gan_type in ("gan", "ragan"):
            # BCEWithLogitsLoss elementwise, numerically stable:
            #   max(x, 0) - x*t + log1p(exp(-|x|))
            soft = jnp.log1p(jnp.exp(-jnp.abs(xf)))
            if target_val == 1.0:                  # max(x,0)-x == max(-x,0)
                return jnp.maximum(-xf, 0.0) + soft
            if target_val == 0.0:
                return jnp.maximum(xf, 0.0) + soft
            return jnp.maximum(xf, 0.0) - xf * jnp.float32(target_val) + soft
        if gan_type == "lsgan":                    # MSELoss elementwise
            d = xf - jnp.float32(target_val)
            return d * d
        # wgan-gp: -mean(x) if real else mean(x)
        return jnp.float32(-1.0 if target_is_real else 1.0) * xf

    def accumulate(n_loop_slabs, mask_rows):
        def slab(i, acc):
            r0 = i * slab_rows
            if not isinstance(r0, int):
                r0 = pl.multiple_of(r0, slab_rows)
            xf = x_ref[pl.ds(r0, slab_rows), :].astype(jnp.float32)
            elt = per_elt(xf)
            if mask_rows is not None:
                rows = (lax.broadcasted_iota(jnp.int32, (slab_rows, LANES), 0)
                        + i * slab_rows)
                elt = jnp.where(rows < mask_rows, elt, 0.0)
            # VPU-only fold of the slab onto the (8,128) accumulator.
            return acc + elt.reshape(-1, SUBLANES, LANES).sum(axis=0)

        acc0 = jnp.zeros((SUBLANES, LANES), jnp.float32)
        if n_loop_slabs == 1:
            acc = slab(0, acc0)
        else:
            acc = lax.fori_loop(0, n_loop_slabs, slab, acc0,
                                unroll=min(8, n_loop_slabs))
        out_ref[...] += acc

    if has_partial or may_clamp:
        # Full, unmasked tiles (skips any clamped duplicate step on the split
        # axis and, if present, the ragged last tile).
        full_limit = n_tiles - 1 if has_partial else n_tiles

        @pl.when(t < full_limit)
        def _():
            accumulate(n_slabs, None)

        if has_partial:
            # Ragged final tile: only loop over the slabs that contain valid
            # rows and mask the overhang (OOB rows in the block are garbage).
            @pl.when(t == n_tiles - 1)
            def _():
                accumulate(n_slabs_last, valid_rows_last)
    else:
        accumulate(n_slabs, None)


def gan_loss(x, target_is_real, gan_type="lsgan",
             real_label_val=1.0, fake_label_val=0.0, block_bytes=BLOCK_BYTES):
    """Pallas equivalent of GANLoss(gan_type, ...)(x, target_is_real).

    NOTE: gan_type / target_is_real select the loss at trace time; they must
    be concrete Python values (same as the PyTorch module's constructor/arg).
    """
    gan_type = gan_type.lower()
    if gan_type not in ("gan", "ragan", "lsgan", "wgan-gp"):
        raise NotImplementedError(f"GAN type [{gan_type}] is not found")
    target_is_real = bool(target_is_real)
    target_val = float(real_label_val) if target_is_real else float(fake_label_val)

    n_valid = int(x.size)
    if n_valid == 0:
        return jnp.float32(float("nan"))

    flat = jnp.ravel(x)                 # zero-copy reshape; keep native dtype
    itemsize = int(x.dtype.itemsize)
    n_rows = n_valid // LANES
    n_tail = n_valid - n_rows * LANES

    def per_elt_f32(xf):                # same math, for the tiny jnp tail path
        if gan_type in ("gan", "ragan"):
            t = jnp.float32(target_val)
            return jnp.maximum(xf, 0.0) - xf * t + jnp.log1p(jnp.exp(-jnp.abs(xf)))
        if gan_type == "lsgan":
            d = xf - jnp.float32(target_val)
            return d * d
        return jnp.float32(-1.0 if target_is_real else 1.0) * xf

    pieces = []

    if n_rows > 0:
        # ---- dtype-aware block sizing: target `block_bytes` per block ----
        row_align = max(SUBLANES, 32 // itemsize)    # 8 f32, 16 bf16, 32 int8
        cap_rows = max(row_align,
                       (block_bytes // (LANES * itemsize)) // row_align * row_align)
        if n_rows <= cap_rows:
            block_rows = _round_up(n_rows, row_align)
        else:
            block_rows = cap_rows
        n_tiles = pl.cdiv(n_rows, block_rows)
        valid_rows_last = n_rows - (n_tiles - 1) * block_rows
        has_partial = valid_rows_last != block_rows

        # Slab size for the in-kernel streaming loop.
        slab_rows = min(MAX_SLAB_ROWS, block_rows)
        while block_rows % slab_rows:
            slab_rows //= 2
        n_slabs = block_rows // slab_rows
        n_slabs_last = pl.cdiv(valid_rows_last, slab_rows)

        # 2-way split across the "parallel" axis (both TCs on v7x); odd tile
        # counts are handled by clamping the index_map + skipping in-kernel.
        num_splits = 2 if n_tiles >= 2 else 1
        tiles_per_split = pl.cdiv(n_tiles, num_splits)
        may_clamp = num_splits * tiles_per_split > n_tiles

        main = flat if n_tail == 0 else flat[: n_rows * LANES]
        x2d = main.reshape(n_rows, LANES)

        kernel = functools.partial(
            _gan_loss_kernel,
            gan_type=gan_type, target_val=target_val,
            target_is_real=target_is_real,
            slab_rows=slab_rows, n_slabs=n_slabs, n_slabs_last=n_slabs_last,
            valid_rows_last=valid_rows_last,
            tiles_per_split=tiles_per_split, n_tiles=n_tiles,
            has_partial=has_partial, may_clamp=may_clamp)

        n_main = n_rows * LANES
        if gan_type in ("gan", "ragan"):
            flops, trans = 6 * n_main, 2 * n_main
        elif gan_type == "lsgan":
            flops, trans = 3 * n_main, 0
        else:
            flops, trans = 2 * n_main, 0

        partial = pl.pallas_call(
            kernel,
            out_shape=jax.ShapeDtypeStruct((num_splits * SUBLANES, LANES),
                                           jnp.float32),
            grid_spec=pltpu.PrefetchScalarGridSpec(
                num_scalar_prefetch=0,
                grid=(num_splits, tiles_per_split),
                in_specs=[pl.BlockSpec(
                    (block_rows, LANES),
                    lambda c, k: (jnp.minimum(c * tiles_per_split + k,
                                              n_tiles - 1), 0))],
                out_specs=pl.BlockSpec((SUBLANES, LANES), lambda c, k: (c, 0)),
            ),
            compiler_params=pltpu.CompilerParams(
                dimension_semantics=("parallel", "arbitrary")),
            cost_estimate=pl.CostEstimate(
                flops=flops, transcendentals=trans,
                bytes_accessed=n_main * itemsize
                + num_splits * SUBLANES * LANES * 4),
        )(x2d)
        pieces.append(jnp.sum(partial))

    if n_tail > 0:
        # Sub-128-element ragged tail: cheaper with plain jnp than a kernel.
        tail = flat[n_rows * LANES:].astype(jnp.float32)
        pieces.append(jnp.sum(per_elt_f32(tail)))

    total = pieces[0]
    for p in pieces[1:]:
        total = total + p
    return total / jnp.float32(n_valid)


def _reference(x, target_is_real, gan_type, real=1.0, fake=0.0):
    xf = x.astype(jnp.float32)
    if gan_type == "wgan-gp":
        return -jnp.mean(xf) if target_is_real else jnp.mean(xf)
    t = jnp.float32(real if target_is_real else fake)
    if gan_type in ("gan", "ragan"):
        return jnp.mean(jnp.maximum(xf, 0.0) - xf * t
                        + jnp.log1p(jnp.exp(-jnp.abs(xf))))
    return jnp.mean((xf - t) ** 2)  # lsgan


if __name__ == "__main__":
    keys = jax.random.split(jax.random.PRNGKey(0), 4)
    # Discriminator logits, NCHW, like the PyTorch module would receive.
    x_main = jax.random.normal(keys[0], (2, 4, 16, 16), dtype=jnp.float32)

    failures = []

    def check(name, x, target_is_real, gan_type, **kw):
        got = jax.block_until_ready(gan_loss(x, target_is_real, gan_type, **kw))
        want = _reference(x, target_is_real, gan_type)
        if not jnp.allclose(got, want, rtol=1e-5, atol=1e-5):
            failures.append(f"{name} {gan_type} real={target_is_real}: "
                            f"{got} vs {want}")

    # All loss types / targets on the canonical small discriminator output.
    for gt in ("gan", "ragan", "lsgan", "wgan-gp"):
        for real in (True, False):
            check("main", x_main, real, gt)

    # bf16 input (dtype-aware block sizing, in-kernel cast).
    check("bf16", x_main.astype(jnp.bfloat16), True, "lsgan")

    # Row count not a multiple of the block -> in-kernel masking of last tile.
    x_odd = jax.random.normal(keys[1], (2, 3, 16, 16), dtype=jnp.float32)
    check("odd-rows", x_odd, True, "gan")

    # Element count not a multiple of 128 -> jnp tail path (prefix via kernel).
    x_tail = jax.random.normal(keys[2], (3, 5, 7, 11), dtype=jnp.float32)
    check("tail", x_tail, False, "lsgan")

    # Larger input -> multi-slab in-kernel fori_loop.
    x_big = jax.random.normal(keys[3], (2, 8, 64, 64), dtype=jnp.float32)
    check("multi-slab", x_big, True, "gan")

    # Force small blocks -> multi-tile, 2-way split, odd tile count (clamp).
    check("multi-tile", x_big, True, "lsgan", block_bytes=40 * LANES * 4)

    if failures:
        for f in failures:
            print("MISMATCH", f)
    else:
        print("KERNEL_OK")
</pallas_src>

<mosaic_0001>
module attributes {stable_mosaic.version = 11 : i64} {
  func.func @_gan_loss_kernel(%arg0: i32, %arg1: i32, %arg2: memref<16x128xf32, #tpu.memory_space<vmem>>, %arg3: memref<8x128xf32, #tpu.memory_space<vmem>>) attributes {dimension_semantics = [#tpu.dimension_semantics<parallel>, #tpu.dimension_semantics<arbitrary>], iteration_bounds = array<i64: 1, 1>, scalar_prefetch = 0 : i64, scratch_operands = 0 : i64, tpu.core_type = #tpu.core_type<tc>, window_params = [{transform_indices = @transform_0, window_bounds = array<i64: 16, 128>}, {transform_indices = @transform_1, window_bounds = array<i64: 8, 128>}]} {
    %c0_i32 = arith.constant 0 : i32
    %0 = arith.cmpi eq, %arg1, %c0_i32 : i32
    %1 = arith.extui %0 : i1 to i32
    %c0_i32_0 = arith.constant 0 : i32
    %2 = arith.cmpi ne, %1, %c0_i32_0 : i32
    scf.if %2 {
      %cst_10 = arith.constant 0.000000e+00 : f32
      %21 = vector.broadcast %cst_10 : f32 to vector<8x128xf32>
      %c0_11 = arith.constant 0 : index
      %c0_12 = arith.constant 0 : index
      %22 = vector.load %arg3[%c0_11, %c0_12] : memref<8x128xf32, #tpu.memory_space<vmem>>, vector<8x128xf32>
      tpu.vector_store %arg3[%c0_11, %c0_12], %21 {strides = array<i32>} : memref<8x128xf32, #tpu.memory_space<vmem>>, vector<8x128xf32>,
    } else {
    }
    %cst = arith.constant 0.000000e+00 : f32
    %3 = vector.broadcast %cst : f32 to vector<8x128xf32>
    %c0 = arith.constant 0 : index
    %c0_1 = arith.constant 0 : index
    %4 = vector.load %arg2[%c0, %c0_1] : memref<16x128xf32, #tpu.memory_space<vmem>>, vector<16x128xf32>
    %5 = math.absf %4 : vector<16x128xf32>
    %cst_2 = arith.constant 0.000000e+00 : f32
    %6 = vector.broadcast %cst_2 : f32 to vector<16x128xf32>
    %7 = arith.subf %6, %5 : vector<16x128xf32>
    %8 = math.exp %7 : vector<16x128xf32>
    %9 = math.log1p %8 : vector<16x128xf32>
    %cst_3 = arith.constant 0.000000e+00 : f32
    %10 = vector.broadcast %cst_3 : f32 to vector<16x128xf32>
    %11 = arith.subf %10, %4 : vector<16x128xf32>
    %cst_4 = arith.constant 0.000000e+00 : f32
    %12 = vector.broadcast %cst_4 : f32 to vector<16x128xf32>
    %13 = arith.maximumf %11, %12 : vector<16x128xf32>
    %14 = arith.addf %13, %9 : vector<16x128xf32>
    %15 = vector.shape_cast %14 : vector<16x128xf32> to vector<2x8x128xf32>
    %cst_5 = arith.constant dense<0.000000e+00> : vector<8x128xf32>
    %16 = vector.multi_reduction <add>, %15, %cst_5 [0] : vector<2x8x128xf32> to vector<8x128xf32>
    %17 = arith.addf %3, %16 : vector<8x128xf32>
    %c0_6 = arith.constant 0 : index
    %c0_7 = arith.constant 0 : index
    %18 = vector.load %arg3[%c0_6, %c0_7] : memref<8x128xf32, #tpu.memory_space<vmem>>, vector<8x128xf32>
    %19 = arith.addf %18, %17 : vector<8x128xf32>
    %c0_8 = arith.constant 0 : index
    %c0_9 = arith.constant 0 : index
    %20 = vector.load %arg3[%c0_8, %c0_9] : memref<8x128xf32, #tpu.memory_space<vmem>>, vector<8x128xf32>
    tpu.vector_store %arg3[%c0_8, %c0_9], %19 {strides = array<i32>} : memref<8x128xf32, #tpu.memory_space<vmem>>, vector<8x128xf32>,
    return
  }
  func.func @transform_0(%arg0: i32, %arg1: i32) -> (i32, i32) {
    %c1_i32 = arith.constant 1 : i32
    %0 = arith.muli %arg0, %c1_i32 : i32
    %1 = arith.addi %0, %arg1 : i32
    %c0_i32 = arith.constant 0 : i32
    %2 = arith.minsi %1, %c0_i32 : i32
    %c0_i32_0 = arith.constant 0 : i32
    %c0_i32_1 = arith.constant 0 : i32
    return %2, %c0_i32_0 : i32, i32
  }
  func.func @transform_1(%arg0: i32, %arg1: i32) -> (i32, i32) {
    %c0_i32 = arith.constant 0 : i32
    %c0_i32_0 = arith.constant 0 : i32
    return %arg0, %c0_i32 : i32, i32
  }
}

</mosaic_0001>

<llo_original>
// kernel: tpu_custom_call.1
$region0: #{tpu_custom_call.1}
  #allocation0 [shape = 'u32[]', space=smem, size = 0x4, offset = 0x4, fixed_abs, tag = 'smem constant byte address 0x4 - core index']
  #allocation1 [shape = 'u32[144,128]{1,0:T(1,128)}', space=vmem, size = 0x12000, scoped, tag = 'internal scratch']
  %s0 = inlined_call_operand.hbm [shape: f32[16,128], index: 0, kind: input, shape index: {}]
  %s1 = inlined_call_operand.hbm [shape: f32[8,128], index: 1, kind: output, shape index: {}]
  %s2 = sld [smem:[#allocation0]]
  $region22: #{tpu_custom_call.1} parent=0
    _
  %s4 = ssub.s32 1, %s2
  %s5 = scalar_select 0, %s4, %s2
  $region1: #{tpu_custom_call.1} parent=0
    #allocation2 [shape = 'u8[8192]{0}', space=vmem, size = 0x2000, scoped, tag = 'input window, operand 0, single buffered']
    #allocation3 [shape = 's32[1]{0}', space=sflag, size = 0x4, scoped, tag = 'scoped memory for tpu_custom_call.1']
    #allocation4 [shape = 's32[1]{0}', space=sflag, size = 0x4, scoped, tag = 'scoped memory for tpu_custom_call.1']
    #allocation5 [shape = 'u8[4096]{0}', space=vmem, size = 0x1000, scoped, tag = 'output window, operand 0, single buffered']
    %6 = vsyncpa [#allocation3], 0
    %7 = vsyncpa [#allocation4], 0
    // Predicated region
    $region2: #{tpu_custom_call.1} parent=1 // pred_check
      _
    $region3: #{tpu_custom_call.1} parent=1 // pred_check_branch
      %9 = sbr.rel (0) target = $region5
    $region4: #{tpu_custom_call.1} parent=1 // pred_region
      %s10 = sadd.s32 0, 0
      %p11 = scmp.lt.s32.totalorder %s10, 0
      %s12 = scalar_select %p11, %s10, 0
      %s13 = smul.u32 2, %s12
      %s15 = ssub.s32 256, 256
      %16 = vsyncadd [#allocation3], %s15
      %s17 = smul.addr %s13, 128
      %s18 = scalar_lea.hbm %s0, %s17
      %s19 = sshll.u32 [#allocation2], 4
      %s20 = int_to_ptr.vmem [resolvable:$true] %s19
      %25 = dma.hbm_to_vmem [thread:$0]  %s18, 256, %s20, [#allocation3], 128, 128, 8
    $region5: #{tpu_custom_call.1} parent=1 // pred_fallthru
      _
    // Predicated region
    $region6: #{tpu_custom_call.1} parent=1 // pred_check
      _
    $region7: #{tpu_custom_call.1} parent=1 // pred_check_branch
      %27 = sbr.rel (0) target = $region9
    $region8: #{tpu_custom_call.1} parent=1 // pred_region
      %28 = dma.done [#allocation3], 256
    $region9: #{tpu_custom_call.1} parent=1 // pred_fallthru
      _
    %s29 = sadd.s32 0, 0
    %p30 = scmp.lt.s32.totalorder %s29, 0
    %s31 = scalar_select %p30, %s29, 0
    %s32 = smul.u32 2, %s31
    %p33 = scmp.eq.s32.totalorder 0, 0
    // Predicated region
    $region10: #{tpu_custom_call.1} parent=1 // pred_check
      %p34 = pneg %p33
    $region11: #{tpu_custom_call.1} parent=1 // pred_check_branch
      %36 = sbr.rel (%p34) target = $region13
    $region12: #{tpu_custom_call.1} parent=1 // pred_region
      %37 = vst [vmem:[#allocation5] sm:$0xff] 0.0
    $region13: #{tpu_custom_call.1} parent=1 // pred_fallthru
      _
    %v38 = vld [vmem:[#allocation2] sm:$0xff]
    %v39 = vld [vmem:[#allocation2 + $0x8] sm:$0xff]
    %v40 = vand.u32 2147483647, %v38
    %v41 = vand.u32 2147483647, %v39
    %v42 = vsub.f32 0.0, %v40
    %v43 = vsub.f32 0.0, %v41
    %v44 = vmul.f32 %v42, 1.442695
    %v45 = vpow.pop %v44
    %v46 = vmul.f32 %v43, 1.442695
    %v47 = vpow.pop %v46
    %v48 = vadd.f32 %v45, 1.0
    %v49 = vlog2.pop %v48
    %v50 = vmul.f32 %v49, 0.6931472
    %v51 = vmul.f32 -0.5, %v45
    %v52 = vadd.f32 %v51, 1.0
    %v53 = vmul.f32 %v52, %v45
    %v54 = vand.u32 2147483647, %v45
    %vm55 = vcmp.lt.f32.partialorder %v54, 0.0004427343
    %v56 = vsel %vm55, %v53, %v50
    %v57 = vadd.f32 %v47, 1.0
    %v58 = vlog2.pop %v57
    %v59 = vmul.f32 %v58, 0.6931472
    %v60 = vmul.f32 -0.5, %v47
    %v61 = vadd.f32 %v60, 1.0
    %v62 = vmul.f32 %v61, %v47
    %v63 = vand.u32 2147483647, %v47
    %vm64 = vcmp.lt.f32.partialorder %v63, 0.0004427343
    %v65 = vsel %vm64, %v62, %v59
    %v66 = vsub.f32 0.0, %v38
    %v67 = vsub.f32 0.0, %v39
    %v68 = vmax.f32 %v66, 0.0
    %v69 = vmax.f32 %v67, 0.0
    %v70 = vadd.f32 %v68, %v56
    %v71 = vadd.f32 %v69, %v65
    %v72 = vadd.f32 %v70, %v71
    %v73 = vadd.f32 %v72, 0.0
    %v74 = vld [vmem:[#allocation5] sm:$0xff]
    %v75 = vadd.f32 %v74, %v73
    %76 = vst [vmem:[#allocation5] sm:$0xff] %v75
    // Predicated region
    $region14: #{tpu_custom_call.1} parent=1 // pred_check
      _
    $region15: #{tpu_custom_call.1} parent=1 // pred_check_branch
      %78 = sbr.rel (0) target = $region17
    $region16: #{tpu_custom_call.1} parent=1 // pred_region
      %s80 = ssub.s32 128, 128
      %81 = vsyncadd [#allocation4], %s80
      %s83 = sshll.u32 [#allocation5], 4
      %s84 = int_to_ptr.vmem [resolvable:$true] %s83
      %86 = dma.vmem_to_hbm [thread:$0]  %s84, 128, %s1, [#allocation4]
    $region17: #{tpu_custom_call.1} parent=1 // pred_fallthru
      _
    // Predicated region
    $region18: #{tpu_custom_call.1} parent=1 // pred_check
      _
    $region19: #{tpu_custom_call.1} parent=1 // pred_check_branch
      %88 = sbr.rel (0) target = $region21
    $region20: #{tpu_custom_call.1} parent=1 // pred_region
      %89 = dma.done [#allocation4], 128
    $region21: #{tpu_custom_call.1} parent=1 // pred_fallthru
      _
    %90 = vsyncpa [#allocation3], 1
    %91 = vsyncpa [#allocation4], 1

</llo_original>
